<compile_context>
chip_gen: v7x
topology: tpu7x:2x2x1
jax: 0.10.0
libtpu: 0.0.40
codegen_flags: <defaults>
</compile_context>

<pallas_src>
import functools

import jax
import jax.numpy as jnp
from jax import lax
from jax.experimental import pallas as pl
from jax.experimental.pallas import tpu as pltpu

EPS = 1e-5


# ---------------------------------------------------------------------------
# Pallas kernels (matmul + folded BN [+ residual] + ReLU hot path)
# ---------------------------------------------------------------------------
def _mm_bn_relu_kernel(x_ref, w_ref, b_ref, o_ref, acc_ref):
    # relu(patches @ W_folded + bias_folded) == relu(bn(conv(x)))
    # (projection-shortcut blocks use the same kernel: the 1x1 conv is folded
    #  into the K dimension of `patches`/`W_folded` and its BN bias into b.)
    q = pl.program_id(2)

    @pl.when(q == 0)
    def _():
        acc_ref[...] = jnp.zeros_like(acc_ref)

    acc_ref[...] += jnp.dot(x_ref[...], w_ref[...],
                            preferred_element_type=jnp.float32)

    @pl.when(q == pl.num_programs(2) - 1)
    def _():
        o_ref[...] = jnp.maximum(acc_ref[...] + b_ref[...], 0.0).astype(o_ref.dtype)


def _mm_bn_add_relu_kernel(x_ref, w_ref, b_ref, s_ref, o_ref, acc_ref):
    # relu(bn(conv(out1)) + x)  -- identity shortcut streamed in f32, added directly
    q = pl.program_id(2)

    @pl.when(q == 0)
    def _():
        acc_ref[...] = jnp.zeros_like(acc_ref)

    acc_ref[...] += jnp.dot(x_ref[...], w_ref[...],
                            preferred_element_type=jnp.float32)

    @pl.when(q == pl.num_programs(2) - 1)
    def _():
        res = acc_ref[...] + b_ref[...] + s_ref[...].astype(jnp.float32)
        o_ref[...] = jnp.maximum(res, 0.0).astype(o_ref.dtype)


# ---------------------------------------------------------------------------
# Generation-dependent VMEM budgeting + tile selection
# ---------------------------------------------------------------------------
def _round_up(x, m):
    return (x + m - 1) // m * m


@functools.lru_cache(maxsize=1)
def _tpu_budget():
    """Returns (vmem_budget_bytes, vmem_limit_bytes, multi_core)."""
    phys = 0
    try:
        info = pltpu.get_tpu_info()
        phys = int(getattr(info, "vmem_capacity_bytes", 0) or 0)
    except Exception:
        phys = 0
    try:
        kind = jax.devices()[0].device_kind.lower()
    except Exception:
        kind = ""
    if "7" in kind:
        # v7x: 64 MiB VMEM per TensorCore, 2 TCs per chip.
        phys = min(phys or (64 << 20), 64 << 20)
    if phys <= 0:
        phys = 64 << 20  # conservative default (v7x-sized)
    budget = int(phys * 5 // 8)                 # 40 MiB on v7x, 80 MiB on v5e/v6e
    vmem_limit = min(int(phys * 3 // 4), 100 << 20)   # 48 MiB on v7x, 96 MiB on v5e/v6e
    multi_core = ("7" in kind) or (phys <= (64 << 20))
    return budget, vmem_limit, multi_core


def _vmem_bytes(tm, tn, tk, in_bytes, out_bytes, has_resid):
    est = 2 * tm * tk * in_bytes          # patches stream (double buffered)
    est += 2 * tk * tn * in_bytes         # weight tile
    est += 2 * 8 * tn * 4                 # bias row (sublane-padded)
    est += 2 * tm * tn * out_bytes        # output stream
    est += tm * tn * 4                    # f32 accumulator scratch
    if has_resid:
        est += 2 * tm * tn * 4            # f32 residual stream
    est += 256 * 1024                     # headroom for Mosaic internals
    return est


_TM_CANDS = (1024, 768, 512, 384, 256, 128, 64, 32, 16, 8)
_TK_CANDS = (2048, 1536, 1152, 1024, 768, 640, 512, 384, 256, 128)


def _tk_options(k):
    # (tk, padded_k) pairs: a single full-K step needs no lane alignment;
    # tiled K must be a multiple of 128 (patches' lane dim).
    opts = [(k, k)]
    for tk in _TK_CANDS:
        if tk < k:
            opts.append((tk, _round_up(k, tk)))
    return opts


def _choose_tiles(m, k, pp, in_bytes, out_bytes, has_resid, budget, multi_core):
    tn_cands = [t for t in (512, 384, 256, 128) if pp % t == 0]
    mp_min = _round_up(m, 8)
    best = None
    for tn in tn_cands:
        for tm in _TM_CANDS:
            if tm > mp_min and tm != 8:
                continue
            mp = _round_up(m, tm)
            for tk, kp in _tk_options(k):
                if _vmem_bytes(tm, tn, tk, in_bytes, out_bytes, has_resid) > budget:
                    continue
                n_m, n_n, n_k = mp // tm, pp // tn, kp // tk
                traffic = (mp * kp * in_bytes * n_n        # patches re-read per Cout tile
                           + kp * pp * in_bytes * n_m      # weights re-read per M tile
                           + mp * pp * out_bytes
                           + (mp * pp * 4 if has_resid else 0))
                penalty = 0
                if mp != m or kp != k:                     # extra HBM pad copy of patches
                    penalty += 3 * mp * kp * in_bytes
                if multi_core and n_m * n_n < 2:           # keep both v7x TCs busy
                    penalty += traffic // 2
                penalty += n_m * n_n * n_k * 2048          # per-grid-step overhead nudge
                score = traffic + penalty
                if best is None or score < best[0]:
                    best = (score, tm, tn, tk, kp, mp)
    if best is None:  # budget extremely tight: minimal tiles
        tk = k if k <= 128 else 128
        kp = k if tk == k else _round_up(k, 128)
        return 8, 128, tk, kp, _round_up(m, 8)
    return best[1:]


# ---------------------------------------------------------------------------
# Fused (conv-as-matmul + BN [+ residual] + ReLU) pallas_call wrapper
# ---------------------------------------------------------------------------
def _fused_conv_matmul(patches, w_fold, b_fold, *, residual=None,
                       out_dtype=jnp.float32):
    """relu(patches @ w_fold + b_fold [+ residual]).

    `patches` is already in the compute dtype. `residual` (identity shortcut)
    is streamed in f32 and added in the epilogue.
    """
    m, k = patches.shape
    p = w_fold.shape[1]
    in_dtype = patches.dtype
    in_bytes = jnp.dtype(in_dtype).itemsize
    out_bytes = jnp.dtype(out_dtype).itemsize
    pp = _round_up(p, 128)                       # lane-dense output stores

    budget, vmem_limit, multi_core = _tpu_budget()
    tm, tn, tk, kp, mp = _choose_tiles(m, k, pp, in_bytes, out_bytes,
                                       residual is not None, budget, multi_core)

    x = patches
    if mp != m or kp != k:
        x = jnp.pad(x, ((0, mp - m), (0, kp - k)))
    w = w_fold.astype(in_dtype)
    if kp != k or pp != p:
        w = jnp.pad(w, ((0, kp - k), (0, pp - p)))
    b = b_fold.astype(jnp.float32)
    if pp != p:
        b = jnp.pad(b, ((0, 0), (0, pp - p)))

    in_specs = [
        pl.BlockSpec((tm, tk), lambda i, j, q: (i, q)),
        pl.BlockSpec((tk, tn), lambda i, j, q: (q, j)),
        pl.BlockSpec((1, tn), lambda i, j, q: (0, j)),
    ]
    args = [x, w, b]
    if residual is not None:
        s = residual.astype(jnp.float32)         # keep skip connection in f32
        if mp != m or pp != p:
            s = jnp.pad(s, ((0, mp - m), (0, pp - p)))
        in_specs.append(pl.BlockSpec((tm, tn), lambda i, j, q: (i, j)))
        args.append(s)
        kernel = _mm_bn_add_relu_kernel
    else:
        kernel = _mm_bn_relu_kernel

    flops = 2 * mp * kp * pp
    bytes_accessed = (mp * kp * in_bytes + kp * pp * in_bytes + pp * 4
                      + mp * pp * out_bytes
                      + (mp * pp * 4 if residual is not None else 0))
    cost = pl.CostEstimate(flops=int(flops), transcendentals=0,
                           bytes_accessed=int(bytes_accessed))

    out = pl.pallas_call(
        kernel,
        out_shape=jax.ShapeDtypeStruct((mp, pp), out_dtype),
        grid_spec=pltpu.PrefetchScalarGridSpec(
            num_scalar_prefetch=0,
            grid=(mp // tm, pp // tn, kp // tk),
            in_specs=in_specs,
            out_specs=pl.BlockSpec((tm, tn), lambda i, j, q: (i, j)),
            scratch_shapes=[pltpu.VMEM((tm, tn), jnp.float32)],
        ),
        compiler_params=pltpu.CompilerParams(
            dimension_semantics=("parallel", "parallel", "arbitrary"),
            vmem_limit_bytes=vmem_limit,
        ),
        cost_estimate=cost,
    )(*args)
    return out[:m, :p]


# ---------------------------------------------------------------------------
# Glue: im2col, BN folding, NCHW <-> flattened-NHWC plumbing (plain JAX)
# ---------------------------------------------------------------------------
def _im2col(x_nhwc, k, stride, pad):
    n, h, w, c = x_nhwc.shape
    xp = jnp.pad(x_nhwc, ((0, 0), (pad, pad), (pad, pad), (0, 0)))
    ho = (h + 2 * pad - k) // stride + 1
    wo = (w + 2 * pad - k) // stride + 1
    taps = []
    for dy in range(k):
        for dx in range(k):
            taps.append(xp[:, dy:dy + ho * stride:stride, dx:dx + wo * stride:stride, :])
    patches = jnp.stack(taps, axis=3)  # (N, Ho, Wo, k*k, C) -- tap-major, channel-minor
    return patches.reshape(n * ho * wo, k * k * c), ho, wo


def _fold_bn(w_mat, gamma, beta, mean, var):
    scale = gamma / jnp.sqrt(var + EPS)
    return w_mat * scale[None, :], (beta - mean * scale)[None, :]


def basic_block_forward(x_nchw, params, stride, *, compute_dtype=jnp.bfloat16):
    n, cin, h, w = x_nchw.shape
    planes = params["w1"].shape[0]
    # NCHW <-> NHWC transposes only at the module boundary (PyTorch interface);
    # the hot path stays NHWC end-to-end.
    x_nhwc = jnp.transpose(x_nchw, (0, 2, 3, 1))
    x_c = x_nhwc.astype(compute_dtype)           # cast once, before im2col

    # conv1 + bn1 + relu (Pallas kernel 1)
    w1_mat = jnp.transpose(params["w1"], (2, 3, 1, 0)).reshape(9 * cin, planes)
    w1_fold, b1_fold = _fold_bn(w1_mat, params["g1"], params["b1"],
                                params["m1"], params["v1"])
    p1, ho, wo = _im2col(x_c, 3, stride, 1)
    out1 = _fused_conv_matmul(p1, w1_fold, b1_fold, out_dtype=compute_dtype)
    out1_nhwc = out1.reshape(n, ho, wo, planes)

    # conv2 + bn2 + shortcut + relu (Pallas kernel 2)
    w2_mat = jnp.transpose(params["w2"], (2, 3, 1, 0)).reshape(9 * planes, planes)
    w2_fold, b2_fold = _fold_bn(w2_mat, params["g2"], params["b2"],
                                params["m2"], params["v2"])
    p2, _, _ = _im2col(out1_nhwc, 3, 1, 1)

    if stride != 1 or cin != planes:
        # Projection shortcut (1x1 strided conv + BN) folded into the main
        # matmul along K; both BN biases folded into a single bias row.
        ws_mat = params["ws"][:, :, 0, 0].T      # (Cin, planes)
        ws_fold, bs_fold = _fold_bn(ws_mat, params["gs"], params["bs"],
                                    params["ms"], params["vs"])
        s_flat = x_c[:, ::stride, ::stride, :].reshape(n * ho * wo, cin)
        p_cat = jnp.concatenate([p2, s_flat], axis=1)
        w_cat = jnp.concatenate([w2_fold, ws_fold], axis=0)
        out = _fused_conv_matmul(p_cat, w_cat, b2_fold + bs_fold,
                                 out_dtype=jnp.float32)
    else:
        # identity shortcut: residual tile streamed in (kept f32) and added.
        s_flat = x_nhwc.reshape(n * ho * wo, planes)
        out = _fused_conv_matmul(p2, w2_fold, b2_fold,
                                 residual=s_flat, out_dtype=jnp.float32)

    return jnp.transpose(out.reshape(n, ho, wo, planes), (0, 3, 1, 2))  # back to NCHW


# ---------------------------------------------------------------------------
# Pure-JAX reference (mirrors the PyTorch forward, eval-mode BN) + params
# ---------------------------------------------------------------------------
def _bn_ref(x, g, b, m, v):
    g, b, m, v = (t[None, :, None, None] for t in (g, b, m, v))
    return (x - m) / jnp.sqrt(v + EPS) * g + b


def ref_forward(x, params, stride):
    conv = functools.partial(
        lax.conv_general_dilated,
        dimension_numbers=("NCHW", "OIHW", "NCHW"),
        precision=lax.Precision.HIGHEST,
    )
    out = conv(x, params["w1"], (stride, stride), ((1, 1), (1, 1)))
    out = jax.nn.relu(_bn_ref(out, params["g1"], params["b1"], params["m1"], params["v1"]))
    out = conv(out, params["w2"], (1, 1), ((1, 1), (1, 1)))
    out = _bn_ref(out, params["g2"], params["b2"], params["m2"], params["v2"])
    cin, planes = x.shape[1], params["w1"].shape[0]
    if stride != 1 or cin != planes:
        sc = conv(x, params["ws"], (stride, stride), ((0, 0), (0, 0)))
        sc = _bn_ref(sc, params["gs"], params["bs"], params["ms"], params["vs"])
    else:
        sc = x
    return jax.nn.relu(out + sc)


def make_params(key, in_planes, planes, stride):
    ks = jax.random.split(key, 11)
    p = {
        "w1": 0.1 * jax.random.normal(ks[0], (planes, in_planes, 3, 3), jnp.float32),
        "g1": 1.0 + 0.1 * jax.random.normal(ks[1], (planes,), jnp.float32),
        "b1": 0.1 * jax.random.normal(ks[2], (planes,), jnp.float32),
        "m1": 0.1 * jax.random.normal(ks[3], (planes,), jnp.float32),
        "v1": jax.random.uniform(ks[4], (planes,), jnp.float32, 0.5, 1.5),
        "w2": 0.1 * jax.random.normal(ks[5], (planes, planes, 3, 3), jnp.float32),
        "g2": 1.0 + 0.1 * jax.random.normal(ks[6], (planes,), jnp.float32),
        "b2": 0.1 * jax.random.normal(ks[7], (planes,), jnp.float32),
        "m2": 0.1 * jax.random.normal(ks[8], (planes,), jnp.float32),
        "v2": jax.random.uniform(ks[9], (planes,), jnp.float32, 0.5, 1.5),
    }
    if stride != 1 or in_planes != planes:
        ks2 = jax.random.split(ks[10], 5)
        p.update({
            "ws": 0.1 * jax.random.normal(ks2[0], (planes, in_planes, 1, 1), jnp.float32),
            "gs": 1.0 + 0.1 * jax.random.normal(ks2[1], (planes,), jnp.float32),
            "bs": 0.1 * jax.random.normal(ks2[2], (planes,), jnp.float32),
            "ms": 0.1 * jax.random.normal(ks2[3], (planes,), jnp.float32),
            "vs": jax.random.uniform(ks2[4], (planes,), jnp.float32, 0.5, 1.5),
        })
    return p


if __name__ == "__main__":
    key = jax.random.PRNGKey(0)
    k_x, k_pa, k_pb = jax.random.split(key, 3)

    # NCHW input, as in PyTorch
    x = jax.random.normal(k_x, (2, 4, 16, 16), jnp.float32)

    # Config A: stride=2, in_planes=4 -> planes=8 (projection shortcut path)
    params_a = make_params(k_pa, 4, 8, 2)
    # Config B: stride=1, in_planes=planes=4 (identity shortcut path)
    params_b = make_params(k_pb, 4, 4, 1)

    ref_a = ref_forward(x, params_a, 2)
    ref_b = ref_forward(x, params_b, 1)

    # Exact f32 validation path -- tight tolerance vs reference.
    out_a = jax.block_until_ready(
        basic_block_forward(x, params_a, 2, compute_dtype=jnp.float32))
    out_b = jax.block_until_ready(
        basic_block_forward(x, params_b, 1, compute_dtype=jnp.float32))
    ok = bool(
        jnp.allclose(out_a, ref_a, atol=1e-3, rtol=1e-3)
        and jnp.allclose(out_b, ref_b, atol=1e-3, rtol=1e-3)
    )

    # Default bf16 compute path (perf mode: bf16 operands, f32 accumulate,
    # f32 identity residual).
    out_a16 = jax.block_until_ready(basic_block_forward(x, params_a, 2))
    out_b16 = jax.block_until_ready(basic_block_forward(x, params_b, 1))
    ok = ok and bool(
        jnp.allclose(out_a16, ref_a, atol=5e-2, rtol=5e-2)
        and jnp.allclose(out_b16, ref_b, atol=5e-2, rtol=5e-2)
    )

    if not ok:
        raise AssertionError("Pallas BasicBlock output mismatch vs JAX reference")
    print("KERNEL_OK")
</pallas_src>

<mosaic_0001>
module attributes {stable_mosaic.version = 11 : i64} {
  func.func @_mm_bn_relu_kernel(%arg0: i32, %arg1: i32, %arg2: i32, %arg3: memref<64x36xf32, #tpu.memory_space<vmem>>, %arg4: memref<36x128xf32, #tpu.memory_space<vmem>>, %arg5: memref<1x128xf32, #tpu.memory_space<vmem>>, %arg6: memref<64x128xf32, #tpu.memory_space<vmem>>, %arg7: memref<64x128xf32, #tpu.memory_space<vmem>>) attributes {dimension_semantics = [#tpu.dimension_semantics<parallel>, #tpu.dimension_semantics<parallel>, #tpu.dimension_semantics<arbitrary>], iteration_bounds = array<i64: 2, 1, 1>, scalar_prefetch = 0 : i64, scratch_operands = 1 : i64, tpu.core_type = #tpu.core_type<tc>, window_params = [{transform_indices = @transform_0, window_bounds = array<i64: 64, 36>}, {transform_indices = @transform_1, window_bounds = array<i64: 36, 128>}, {transform_indices = @transform_2, window_bounds = array<i64: 1, 128>}, {transform_indices = @transform_3, window_bounds = array<i64: 64, 128>}]} {
    %c0_i32 = arith.constant 0 : i32
    %0 = arith.cmpi eq, %arg2, %c0_i32 : i32
    %1 = arith.extui %0 : i1 to i32
    %c0_i32_0 = arith.constant 0 : i32
    %2 = arith.cmpi ne, %1, %c0_i32_0 : i32
    scf.if %2 {
      %cst_10 = arith.constant 0.000000e+00 : f32
      %12 = vector.broadcast %cst_10 : f32 to vector<64x128xf32>
      %c0_11 = arith.constant 0 : index
      %c0_12 = arith.constant 0 : index
      %13 = vector.load %arg7[%c0_11, %c0_12] : memref<64x128xf32, #tpu.memory_space<vmem>>, vector<64x128xf32>
      tpu.vector_store %arg7[%c0_11, %c0_12], %12 {strides = array<i32>} : memref<64x128xf32, #tpu.memory_space<vmem>>, vector<64x128xf32>,
    } else {
    }
    %c0 = arith.constant 0 : index
    %c0_1 = arith.constant 0 : index
    %3 = vector.load %arg7[%c0, %c0_1] : memref<64x128xf32, #tpu.memory_space<vmem>>, vector<64x128xf32>
    %c0_2 = arith.constant 0 : index
    %c0_3 = arith.constant 0 : index
    %4 = vector.load %arg3[%c0_2, %c0_3] : memref<64x36xf32, #tpu.memory_space<vmem>>, vector<64x36xf32>
    %c0_4 = arith.constant 0 : index
    %c0_5 = arith.constant 0 : index
    %5 = vector.load %arg4[%c0_4, %c0_5] : memref<36x128xf32, #tpu.memory_space<vmem>>, vector<36x128xf32>
    %cst = arith.constant dense<0.000000e+00> : vector<64x128xf32>
    %6 = tpu.matmul %4, %5, %cst {dimension_numbers = #tpu.dot_dimension_numbers<[1], [0], [0], [1], [0, 0, 1, 1], [], []>} : vector<64x36xf32>, vector<36x128xf32>, vector<64x128xf32> -> vector<64x128xf32>
    %7 = arith.addf %3, %6 : vector<64x128xf32>
    %c0_6 = arith.constant 0 : index
    %c0_7 = arith.constant 0 : index
    %8 = vector.load %arg7[%c0_6, %c0_7] : memref<64x128xf32, #tpu.memory_space<vmem>>, vector<64x128xf32>
    tpu.vector_store %arg7[%c0_6, %c0_7], %7 {strides = array<i32>} : memref<64x128xf32, #tpu.memory_space<vmem>>, vector<64x128xf32>,
    %c0_i32_8 = arith.constant 0 : i32
    %9 = arith.cmpi eq, %arg2, %c0_i32_8 : i32
    %10 = arith.extui %9 : i1 to i32
    %c0_i32_9 = arith.constant 0 : i32
    %11 = arith.cmpi ne, %10, %c0_i32_9 : i32
    scf.if %11 {
      %c0_10 = arith.constant 0 : index
      %c0_11 = arith.constant 0 : index
      %12 = vector.load %arg7[%c0_10, %c0_11] : memref<64x128xf32, #tpu.memory_space<vmem>>, vector<64x128xf32>
      %c0_12 = arith.constant 0 : index
      %c0_13 = arith.constant 0 : index
      %13 = vector.load %arg5[%c0_12, %c0_13] : memref<1x128xf32, #tpu.memory_space<vmem>>, vector<1x128xf32>
      %14 = vector.broadcast %13 : vector<1x128xf32> to vector<64x128xf32>
      %15 = arith.addf %12, %14 : vector<64x128xf32>
      %cst_14 = arith.constant 0.000000e+00 : f32
      %16 = vector.broadcast %cst_14 : f32 to vector<64x128xf32>
      %17 = arith.maximumf %15, %16 : vector<64x128xf32>
      %c0_15 = arith.constant 0 : index
      %c0_16 = arith.constant 0 : index
      %18 = vector.load %arg6[%c0_15, %c0_16] : memref<64x128xf32, #tpu.memory_space<vmem>>, vector<64x128xf32>
      tpu.vector_store %arg6[%c0_15, %c0_16], %17 {strides = array<i32>} : memref<64x128xf32, #tpu.memory_space<vmem>>, vector<64x128xf32>,
    } else {
    }
    return
  }
  func.func @transform_0(%arg0: i32, %arg1: i32, %arg2: i32) -> (i32, i32) {
    %c0_i32 = arith.constant 0 : i32
    return %arg0, %arg2 : i32, i32
  }
  func.func @transform_1(%arg0: i32, %arg1: i32, %arg2: i32) -> (i32, i32) {
    %c0_i32 = arith.constant 0 : i32
    return %arg2, %arg1 : i32, i32
  }
  func.func @transform_2(%arg0: i32, %arg1: i32, %arg2: i32) -> (i32, i32) {
    %c0_i32 = arith.constant 0 : i32
    %c0_i32_0 = arith.constant 0 : i32
    return %c0_i32, %arg1 : i32, i32
  }
  func.func @transform_3(%arg0: i32, %arg1: i32, %arg2: i32) -> (i32, i32) {
    %c0_i32 = arith.constant 0 : i32
    return %arg0, %arg1 : i32, i32
  }
}

</mosaic_0001>

<llo_original>
// kernel: tpu_custom_call.1
$region0: #{tpu_custom_call.1}
  #allocation0 [shape = 'u32[]', space=smem, size = 0x4, offset = 0x4, fixed_abs, tag = 'smem constant byte address 0x4 - core index']
  #allocation1 [shape = 'u32[144,128]{1,0:T(1,128)}', space=vmem, size = 0x12000, scoped, tag = 'internal scratch']
  #allocation2 [shape = 'f32[64,128]{1,0:T(8,128)}', space=vmem, size = 0x8000, scoped, tag = 'scratch operand']
  %s0 = inlined_call_operand.vmem [shape: f32[128,36], index: 0, kind: input, shape index: {}]
  %s1 = inlined_call_operand.vmem [shape: f32[36,128], index: 1, kind: input, shape index: {}]
  %s2 = inlined_call_operand.vmem [shape: f32[1,128], index: 2, kind: input, shape index: {}]
  %s3 = inlined_call_operand.hbm [shape: f32[128,128], index: 3, kind: output, shape index: {}]
  %s4 = sld [smem:[#allocation0]]
  $region53: #{tpu_custom_call.1} parent=0
    _
  %s6 = ssub.s32 1, %s4
  %s7 = scalar_select 0, %s6, %s4
  $region1: #{tpu_custom_call.1} parent=0
    #allocation3 [shape = 'u8[65536]{0}', space=vmem, size = 0x10000, scoped, tag = 'output window, operand 0']
    #allocation4 [shape = 's32[2]{0}', space=sflag, size = 0x8, scoped, tag = 'scoped memory for tpu_custom_call.1']
    %8 = vsyncpa [#allocation4], 0
    %s9 = scalar_lea.sflag [#allocation4], 1
    %10 = vsyncpa %s9, 0
    loop: start=0, step=1, limit=4
    $region2: #{tpu_custom_call.1} parent=1 // loop_pre_header
      _
    $region3: #{tpu_custom_call.1} parent=1 // loop_header
      %s12 = sphi 0, %s16
      %p13 = scmp.ge.s32.totalorder %s12, 4
      %s19 = sphi 0, %s38
      %s20 = sphi 0, %s34
      %s21 = sphi 0, %s30
      %s22 = sphi 0, %s19
      %s23 = sphi 0, %s20
      %s24 = sphi 0, %s21
      %s25 = sphi 0, %s22
      %s26 = sphi 0, %s23
      %s27 = sphi 0, %s24
      %s43 = sphi 0, %s45
      %s46 = sphi 0, %s43
      %s47 = sphi 0, %s46
      %s63 = sphi 0, %s47
      %s71 = sphi 0, %s73
      %s74 = sphi 0, %s71
      %s75 = sphi 0, %s74
      %s91 = sphi 0, %s75
      %s97 = sphi 0, %s99
      %s100 = sphi 0, %s97
      %s101 = sphi 0, %s100
      %s117 = sphi 0, %s101
      %s125 = sphi 0, %s127
      %s128 = sphi 0, %s125
      %s129 = sphi 0, %s128
      %s145 = sphi 0, %s129
    $region4: #{tpu_custom_call.1} parent=1 // loop_header_branch
      %15 = sbr.rel (%p13) target = $region8
    $region5: #{tpu_custom_call.1} parent=1 // loop_body
      %s17 = ssub.s32 %s12, 1
      %s18 = ssub.s32 %s12, 2
      %s28 = sadd.s32 1, %s21
      %p29 = scmp.ge.s32.totalorder %s28, 1
      %s30 = scalar_select %p29, 0, %s28
      %s31 = sadd.s32 1, %s20
      %s32 = scalar_select %p29, %s31, %s20
      %p33 = scmp.ge.s32.totalorder %s32, 1
      %s34 = scalar_select %p33, 0, %s32
      %s35 = sadd.s32 1, %s19
      %s36 = scalar_select %p33, %s35, %s19
      %p37 = scmp.ge.s32.totalorder %s36, 2
      %s38 = scalar_select %p37, 0, %s36
      %s39 = ssub.s32 %s19, %s38
      %s40 = ssub.s32 %s21, %s30
      %s41 = sor.u32 %s39, %s40
      %p42 = scmp.eq.s32.totalorder %s41, 0
      %s44 = sadd.s32 %s43, 1
      %s45 = scalar_select %p42, %s43, %s44
      %p48 = pneg %p42
      %p49 = scmp.eq.s32.totalorder %s12, 1
      %p50 = por %p48, %p49
      %p51 = scmp.ne.s32.totalorder %s43, %s46
      %p52 = scmp.eq.s32.totalorder %s12, 0
      %p53 = por %p51, %p52
      %p54 = scmp.ne.s32.totalorder %s43, %s46
      %p55 = scmp.eq.s32.totalorder %s17, 1
      %p56 = por %p54, %p55
      %p57 = scmp.ne.s32.totalorder %s46, %s47
      %p58 = scmp.eq.s32.totalorder %s17, 0
      %p59 = por %p57, %p58
      %p60 = scmp.ne.s32.totalorder %s46, %s47
      %p61 = scmp.eq.s32.totalorder %s18, 1
      %p62 = por %p60, %p61
      %p64 = scmp.ne.s32.totalorder %s47, %s63
      %p65 = scmp.eq.s32.totalorder %s18, 0
      %p66 = por %p64, %p65
      %s67 = ssub.s32 %s21, %s30
      %s68 = ssub.s32 %s20, %s34
      %s69 = sor.u32 %s67, %s68
      %p70 = scmp.eq.s32.totalorder %s69, 0
      %s72 = sadd.s32 %s71, 1
      %s73 = scalar_select %p70, %s71, %s72
      %p76 = pneg %p70
      %p77 = scmp.eq.s32.totalorder %s12, 1
      %p78 = por %p76, %p77
      %p79 = scmp.ne.s32.totalorder %s71, %s74
      %p80 = scmp.eq.s32.totalorder %s12, 0
      %p81 = por %p79, %p80
      %p82 = scmp.ne.s32.totalorder %s71, %s74
      %p83 = scmp.eq.s32.totalorder %s17, 1
      %p84 = por %p82, %p83
      %p85 = scmp.ne.s32.totalorder %s74, %s75
      %p86 = scmp.eq.s32.totalorder %s17, 0
      %p87 = por %p85, %p86
      %p88 = scmp.ne.s32.totalorder %s74, %s75
      %p89 = scmp.eq.s32.totalorder %s18, 1
      %p90 = por %p88, %p89
      %p92 = scmp.ne.s32.totalorder %s75, %s91
      %p93 = scmp.eq.s32.totalorder %s18, 0
      %p94 = por %p92, %p93
      %s95 = ssub.s32 %s20, %s34
      %p96 = scmp.eq.s32.totalorder %s95, 0
      %s98 = sadd.s32 %s97, 1
      %s99 = scalar_select %p96, %s97, %s98
      %p102 = pneg %p96
      %p103 = scmp.eq.s32.totalorder %s12, 1
      %p104 = por %p102, %p103
      %p105 = scmp.ne.s32.totalorder %s97, %s100
      %p106 = scmp.eq.s32.totalorder %s12, 0
      %p107 = por %p105, %p106
      %p108 = scmp.ne.s32.totalorder %s97, %s100
      %p109 = scmp.eq.s32.totalorder %s17, 1
      %p110 = por %p108, %p109
      %p111 = scmp.ne.s32.totalorder %s100, %s101
      %p112 = scmp.eq.s32.totalorder %s17, 0
      %p113 = por %p111, %p112
      %p114 = scmp.ne.s32.totalorder %s100, %s101
      %p115 = scmp.eq.s32.totalorder %s18, 1
      %p116 = por %p114, %p115
      %p118 = scmp.ne.s32.totalorder %s101, %s117
      %p119 = scmp.eq.s32.totalorder %s18, 0
      %p120 = por %p118, %p119
      %s121 = ssub.s32 %s19, %s38
      %s122 = ssub.s32 %s20, %s34
      %s123 = sor.u32 %s121, %s122
      %p124 = scmp.eq.s32.totalorder %s123, 0
      %s126 = sadd.s32 %s125, 1
      %s127 = scalar_select %p124, %s125, %s126
      %p130 = pneg %p124
      %p131 = scmp.eq.s32.totalorder %s12, 1
      %p132 = por %p130, %p131
      %p133 = scmp.ne.s32.totalorder %s125, %s128
      %p134 = scmp.eq.s32.totalorder %s12, 0
      %p135 = por %p133, %p134
      %p136 = scmp.ne.s32.totalorder %s125, %s128
      %p137 = scmp.eq.s32.totalorder %s17, 1
      %p138 = por %p136, %p137
      %p139 = scmp.ne.s32.totalorder %s128, %s129
      %p140 = scmp.eq.s32.totalorder %s17, 0
      %p141 = por %p139, %p140
      %p142 = scmp.ne.s32.totalorder %s128, %s129
      %p143 = scmp.eq.s32.totalorder %s18, 1
      %p144 = por %p142, %p143
      %p146 = scmp.ne.s32.totalorder %s129, %s145
      %p147 = scmp.eq.s32.totalorder %s18, 0
      %p148 = por %p146, %p147
      %p149 = scmp.le.s32.totalorder 1, %s12
      %p150 = scmp.lt.s32.totalorder %s12, 3
      %p151 = pnand %p149, %p150
      %p152 = pneg %p151
      // Predicated region
      $region9: #{tpu_custom_call.1} parent=5 // pred_check
        _
      $region10: #{tpu_custom_call.1} parent=5 // pred_check_branch
        %154 = sbr.rel (%p151) target = $region12
      $region11: #{tpu_custom_call.1} parent=5 // pred_region
        %s155 = ssub.s32 %s12, 1
        // Predicated region
        $region13: #{tpu_custom_call.1} parent=11 // pred_check
          %p156 = pneg %p87
        $region14: #{tpu_custom_call.1} parent=11 // pred_check_branch
          %158 = sbr.rel (%p156) target = $region16
        $region15: #{tpu_custom_call.1} parent=11 // pred_region
          %s159 = smul.u32 5, %s24
          %p160 = scmp.lt.s32.totalorder %s159, 4
          %s161 = scalar_select %p160, %s159, 4
          %p162 = scmp.lt.s32.totalorder %s23, 0
          %s163 = scalar_select %p162, %s23, 0
          %s164 = sadd.s32 %s163, %s161
          %s165 = smul.addr %s164, 8
          %s166 = scalar_lea.vmem %s1, %s165
          %s167 = smul.u32 5, %s24
        $region16: #{tpu_custom_call.1} parent=11 // pred_fallthru
          _
        // Predicated region
        $region17: #{tpu_custom_call.1} parent=11 // pred_check
          %p168 = pneg %p113
        $region18: #{tpu_custom_call.1} parent=11 // pred_check_branch
          %170 = sbr.rel (%p168) target = $region20
        $region19: #{tpu_custom_call.1} parent=11 // pred_region
          %p171 = scmp.lt.s32.totalorder %s23, 0
          %s172 = scalar_select %p171, %s23, 0
          %s173 = scalar_lea.vmem %s2, %s172
        $region20: #{tpu_custom_call.1} parent=11 // pred_fallthru
          _
      $region12: #{tpu_custom_call.1} parent=5 // pred_fallthru
        _
      %p174 = scmp.lt.s32.totalorder %s12, 2
      // Predicated region
      $region21: #{tpu_custom_call.1} parent=5 // pred_check
        %p175 = pneg %p174
      $region22: #{tpu_custom_call.1} parent=5 // pred_check_branch
        %177 = sbr.rel (%p175) target = $region24
      $region23: #{tpu_custom_call.1} parent=5 // pred_region
        // Predicated region
        $region25: #{tpu_custom_call.1} parent=23 // pred_check
          %p178 = pneg %p53
        $region26: #{tpu_custom_call.1} parent=23 // pred_check_branch
          %180 = sbr.rel (%p178) target = $region28
        $region27: #{tpu_custom_call.1} parent=23 // pred_region
          %s181 = smul.u32 8, %s19
          %p182 = scmp.lt.s32.totalorder %s181, 15
          %s183 = scalar_select %p182, %s181, 15
          %p184 = scmp.lt.s32.totalorder %s21, 0
          %s185 = scalar_select %p184, %s21, 0
          %s186 = sadd.s32 %s185, %s183
          %s187 = smul.addr %s186, 8
          %s188 = scalar_lea.vmem %s0, %s187
          %s189 = smul.u32 8, %s19
        $region28: #{tpu_custom_call.1} parent=23 // pred_fallthru
          _
      $region24: #{tpu_custom_call.1} parent=5 // pred_fallthru
        _
      %p190 = scmp.le.s32.totalorder 1, %s12
      %p191 = scmp.lt.s32.totalorder %s12, 3
      %p192 = pnand %p190, %p191
      %p193 = pneg %p192
      // Predicated region
      $region29: #{tpu_custom_call.1} parent=5 // pred_check
        _
      $region30: #{tpu_custom_call.1} parent=5 // pred_check_branch
        %195 = sbr.rel (%p192) target = $region32
      $region31: #{tpu_custom_call.1} parent=5 // pred_region
        %s196 = ssub.s32 %s12, 1
        %s197 = smul.u32 8, %s22
        %p198 = scmp.lt.s32.totalorder %s197, 15
        %s199 = scalar_select %p198, %s197, 15
        %p200 = scmp.lt.s32.totalorder %s24, 0
        %s201 = scalar_select %p200, %s24, 0
        %s202 = sadd.s32 %s201, %s199
        %s203 = smul.addr %s202, 8
        %s204 = scalar_lea.vmem %s0, %s203
        %p205 = pneg %p59
        %p206 = pneg %p56
        %s207 = smul.u32 5, %s24
        %p208 = scmp.lt.s32.totalorder %s207, 4
        %s209 = scalar_select %p208, %s207, 4
        %p210 = scmp.lt.s32.totalorder %s23, 0
        %s211 = scalar_select %p210, %s23, 0
        %s212 = sadd.s32 %s211, %s209
        %s213 = smul.addr %s212, 8
        %s214 = scalar_lea.vmem %s1, %s213
        %p215 = pneg %p87
        %p216 = pneg %p84
        %p217 = scmp.lt.s32.totalorder %s23, 0
        %s218 = scalar_select %p217, %s23, 0
        %s219 = scalar_lea.vmem %s2, %s218
        %p220 = pneg %p113
        %p221 = pneg %p110
        %p222 = pneg %p141
        %p223 = pneg %p138
        %s224 = sand.u32 %s128, 1
        %s225 = scalar_lea.sflag [#allocation4], %s224
        %s226 = sand.u32 %s128, 1
        %s227 = smul.addr %s226, 64
        %s228 = scalar_lea.vmem [#allocation3], %s227
        %s229 = smul.u32 8, %s22
        %p230 = scmp.lt.s32.totalorder %s229, 15
        %s231 = scalar_select %p230, %s229, 15
        %p232 = scmp.lt.s32.totalorder %s24, 0
        %s233 = scalar_select %p232, %s24, 0
        %s234 = sadd.s32 %s233, %s231
        %s235 = smul.addr %s234, 8
        %s236 = scalar_lea.vmem %s0, %s235
        %s237 = smul.u32 8, %s22
        %s238 = smul.u32 5, %s24
        %p239 = scmp.lt.s32.totalorder %s238, 4
        %s240 = scalar_select %p239, %s238, 4
        %p241 = scmp.lt.s32.totalorder %s23, 0
        %s242 = scalar_select %p241, %s23, 0
        %s243 = sadd.s32 %s242, %s240
        %s244 = smul.addr %s243, 8
        %s245 = scalar_lea.vmem %s1, %s244
        %s246 = smul.u32 5, %s24
        %p247 = scmp.lt.s32.totalorder %s23, 0
        %s248 = scalar_select %p247, %s23, 0
        %s249 = scalar_lea.vmem %s2, %s248
        %s250 = smul.u32 8, %s22
        %p251 = scmp.eq.s32.totalorder %s24, 0
        // Predicated region
        $region33: #{tpu_custom_call.1} parent=31 // pred_check
          %p252 = pneg %p251
        $region34: #{tpu_custom_call.1} parent=31 // pred_check_branch
          %254 = sbr.rel (%p252) target = $region36
        $region35: #{tpu_custom_call.1} parent=31 // pred_region
          %255 = vst [vmem:[#allocation2] sm:$0xff] 0.0
          %256 = vst [vmem:[#allocation2 + $0x8] sm:$0xff] 0.0
          %257 = vst [vmem:[#allocation2 + $0x10] sm:$0xff] 0.0
          %258 = vst [vmem:[#allocation2 + $0x18] sm:$0xff] 0.0
          %259 = vst [vmem:[#allocation2 + $0x20] sm:$0xff] 0.0
          %260 = vst [vmem:[#allocation2 + $0x28] sm:$0xff] 0.0
          %261 = vst [vmem:[#allocation2 + $0x30] sm:$0xff] 0.0
          %262 = vst [vmem:[#allocation2 + $0x38] sm:$0xff] 0.0
        $region36: #{tpu_custom_call.1} parent=31 // pred_fallthru
          _
        %v263 = vld [vmem:[#allocation2] sm:$0xff]
        %v264 = vld [vmem:[#allocation2 + $0x8] sm:$0xff]
        %v265 = vld [vmem:[#allocation2 + $0x10] sm:$0xff]
        %v266 = vld [vmem:[#allocation2 + $0x18] sm:$0xff]
        %v267 = vld [vmem:[#allocation2 + $0x20] sm:$0xff]
        %v268 = vld [vmem:[#allocation2 + $0x28] sm:$0xff]
        %v269 = vld [vmem:[#allocation2 + $0x30] sm:$0xff]
        %v270 = vld [vmem:[#allocation2 + $0x38] sm:$0xff]
        %v271 = vld [vmem:[%s236] sm:$0xff]
        %v272 = vld [vmem:[%s236 + $0x8] sm:$0xff]
        %v273 = vld [vmem:[%s236 + $0x10] sm:$0xff]
        %v274 = vld [vmem:[%s236 + $0x18] sm:$0xff]
        %v275 = vld [vmem:[%s236 + $0x20] sm:$0xff]
        %v276 = vld [vmem:[%s236 + $0x28] sm:$0xff]
        %v277 = vld [vmem:[%s236 + $0x30] sm:$0xff]
        %v278 = vld [vmem:[%s236 + $0x38] sm:$0xff]
        %v279 = vld [vmem:[%s245] sm:$0xff]
        %v280 = vld [vmem:[%s245 + $0x8] sm:$0xff]
        %v281 = vld [vmem:[%s245 + $0x10] sm:$0xff]
        %v282 = vld [vmem:[%s245 + $0x18] sm:$0xff]
        %v283 = vld [vmem:[%s245 + $0x20] sm:$0xf]
        %vm284 = vcmask 293888
        %v286 = vsel %vm284, %v271, 0
        %v289 = vsel %vm284, %v272, 0
        %v292 = vsel %vm284, %v273, 0
        %v295 = vsel %vm284, %v274, 0
        %v298 = vsel %vm284, %v275, 0
        %v301 = vsel %vm284, %v276, 0
        %v304 = vsel %vm284, %v277, 0
        %v307 = vsel %vm284, %v278, 0
        %vm309 = vcmask 1043456
        %v311 = vsel %vm309, %v283, 0
        %313 = vmatprep.subr.mxu0 0.0
        %314 = vmatpush1.msra.mxu0 %v279
        %315 = vmatprep.subr.mxu0 0.0
        %316 = vmatpush1.msra.mxu0 %v280
        %317 = vmatprep.subr.mxu0 0.0
        %318 = vmatpush1.msra.mxu0 %v281
        %319 = vmatprep.subr.mxu0 0.0
        %320 = vmatpush1.msra.mxu0 %v282
        %321 = vmatprep.subr.mxu0 0.0
        %322 = vmatpush1.msra.mxu0 %v311
        %323 = vmatprep.subr.mxu0 0.0
        %324 = vmatpush1.msra.mxu0 0.0
        %325 = vmatprep.subr.mxu0 0.0
        %326 = vmatpush1.msra.mxu0 0.0
        %327 = vmatprep.subr.mxu0 0.0
        %328 = vmatpush1.msra.mxu0 0.0
        %329 = vmatprep.subr.mxu0 0.0
        %330 = vmatpush1.msra.mxu0 0.0
        %331 = vmatprep.subr.mxu0 0.0
        %332 = vmatpush1.msra.mxu0 0.0
        %333 = vmatprep.subr.mxu0 0.0
        %334 = vmatpush1.msra.mxu0 0.0
        %335 = vmatprep.subr.mxu0 0.0
        %336 = vmatpush1.msra.mxu0 0.0
        %337 = vmatprep.subr.mxu0 0.0
        %338 = vmatpush1.msra.mxu0 0.0
        %339 = vmatprep.subr.mxu0 0.0
        %340 = vmatpush1.msra.mxu0 0.0
        %341 = vmatprep.subr.mxu0 0.0
        %342 = vmatpush1.msra.mxu0 0.0
        %343 = vmatprep.subr.mxu0 0.0
        %344 = vmatpush1.msra.mxu0 0.0
        %345 = vmatprep.subr.mxu0 0.0
        %346 = vmatpush1.msra.mxu0 0.0
        %347 = vmatprep.subr.mxu0 0.0
        %348 = vmatpush1.msra.mxu0 0.0
        %349 = vmatprep.subr.mxu0 0.0
        %350 = vmatpush1.msra.mxu0 0.0
        %351 = vmatprep.subr.mxu0 0.0
        %352 = vmatpush1.msra.mxu0 0.0
        %353 = vmatprep.subr.mxu0 0.0
        %354 = vmatpush1.msra.mxu0 0.0
        %355 = vmatprep.subr.mxu0 0.0
        %356 = vmatpush1.msra.mxu0 0.0
        %357 = vmatprep.subr.mxu0 0.0
        %358 = vmatpush1.msra.mxu0 0.0
        %359 = vmatprep.subr.mxu0 0.0
        %360 = vmatpush1.msra.mxu0 0.0
        %361 = vmatprep.subr.mxu0 0.0
        %362 = vmatpush1.msra.mxu0 0.0
        %363 = vmatprep.subr.mxu0 0.0
        %364 = vmatpush1.msra.mxu0 0.0
        %365 = vmatprep.subr.mxu0 0.0
        %366 = vmatpush1.msra.mxu0 0.0
        %367 = vmatprep.subr.mxu0 0.0
        %368 = vmatpush1.msra.mxu0 0.0
        %369 = vmatprep.subr.mxu0 0.0
        %370 = vmatpush1.msra.mxu0 0.0
        %371 = vmatprep.subr.mxu0 0.0
        %372 = vmatpush1.msra.mxu0 0.0
        %373 = vmatprep.subr.mxu0 0.0
        %374 = vmatpush1.msra.mxu0 0.0
        %375 = vmatprep.subr.mxu0 0.0
        %376 = vmatpush1.msra.mxu0 0.0
        %377 = vmatprep.mubr.f32.mxu0 0.0
        %378 = vmatmul.mubr.f32.gmra.mrb[0].mxu0 %v286
        %v379 = vpop.f32.mrb[0].mxu0
        %v380 = vadd.f32 0.0, %v379
        %v381 = vpop.f32.mrb[0].mxu0
        %382 = vmatprep.mubr.f32.mxu0 0.0
        %383 = vmatmul.mubr.f32.gmra.mrb[0].mxu0 %v289
        %v384 = vpop.f32.mrb[0].mxu0
        %v385 = vadd.f32 0.0, %v384
        %v386 = vpop.f32.mrb[0].mxu0
        %387 = vmatprep.mubr.f32.mxu0 0.0
        %388 = vmatmul.mubr.f32.gmra.mrb[0].mxu0 %v292
        %v389 = vpop.f32.mrb[0].mxu0
        %v390 = vadd.f32 0.0, %v389
        %v391 = vpop.f32.mrb[0].mxu0
        %392 = vmatprep.mubr.f32.mxu0 0.0
        %393 = vmatmul.mubr.f32.gmra.mrb[0].mxu0 %v295
        %v394 = vpop.f32.mrb[0].mxu0
        %v395 = vadd.f32 0.0, %v394
        %v396 = vpop.f32.mrb[0].mxu0
        %397 = vmatprep.mubr.f32.mxu0 0.0
        %398 = vmatmul.mubr.f32.gmra.mrb[0].mxu0 %v298
        %v399 = vpop.f32.mrb[0].mxu0
        %v400 = vadd.f32 0.0, %v399
        %v401 = vpop.f32.mrb[0].mxu0
        %402 = vmatprep.mubr.f32.mxu0 0.0
        %403 = vmatmul.mubr.f32.gmra.mrb[0].mxu0 %v301
        %v404 = vpop.f32.mrb[0].mxu0
        %v405 = vadd.f32 0.0, %v404
        %v406 = vpop.f32.mrb[0].mxu0
        %407 = vmatprep.mubr.f32.mxu0 0.0
        %408 = vmatmul.mubr.f32.gmra.mrb[0].mxu0 %v304
        %v409 = vpop.f32.mrb[0].mxu0
        %v410 = vadd.f32 0.0, %v409
        %v411 = vpop.f32.mrb[0].mxu0
        %412 = vmatprep.mubr.f32.mxu0 0.0
        %413 = vmatmul.mubr.f32.gmra.mrb[0].mxu0 %v307
        %v414 = vpop.f32.mrb[0].mxu0
        %v415 = vadd.f32 0.0, %v414
        %v416 = vpop.f32.mrb[0].mxu0
        %417 = vdwg.mxu0
        %v418 = vadd.f32 %v263, %v380
        %v419 = vadd.f32 %v264, %v385
        %v420 = vadd.f32 %v265, %v390
        %v421 = vadd.f32 %v266, %v395
        %v422 = vadd.f32 %v267, %v400
        %v423 = vadd.f32 %v268, %v405
        %v424 = vadd.f32 %v269, %v410
        %v425 = vadd.f32 %v270, %v415
        %426 = vst [vmem:[#allocation2] sm:$0xff] %v418
        %427 = vst [vmem:[#allocation2 + $0x8] sm:$0xff] %v419
        %428 = vst [vmem:[#allocation2 + $0x10] sm:$0xff] %v420
        %429 = vst [vmem:[#allocation2 + $0x18] sm:$0xff] %v421
        %430 = vst [vmem:[#allocation2 + $0x20] sm:$0xff] %v422
        %431 = vst [vmem:[#allocation2 + $0x28] sm:$0xff] %v423
        %432 = vst [vmem:[#allocation2 + $0x30] sm:$0xff] %v424
        %433 = vst [vmem:[#allocation2 + $0x38] sm:$0xff] %v425
        // Predicated region
        $region37: #{tpu_custom_call.1} parent=31 // pred_check
          %p434 = pneg %p251
        $region38: #{tpu_custom_call.1} parent=31 // pred_check_branch
          %436 = sbr.rel (%p434) target = $region40
        $region39: #{tpu_custom_call.1} parent=31 // pred_region
          %v437 = vld [vmem:[#allocation2] sm:$0xff]
          %v438 = vld [vmem:[#allocation2 + $0x8] sm:$0xff]
          %v439 = vld [vmem:[#allocation2 + $0x10] sm:$0xff]
          %v440 = vld [vmem:[#allocation2 + $0x18] sm:$0xff]
          %v441 = vld [vmem:[#allocation2 + $0x20] sm:$0xff]
          %v442 = vld [vmem:[#allocation2 + $0x28] sm:$0xff]
          %v443 = vld [vmem:[#allocation2 + $0x30] sm:$0xff]
          %v444 = vld [vmem:[#allocation2 + $0x38] sm:$0xff]
          %v445 = vld [vmem:[%s249] sm:$0x1]
          %v447 = vlaneseq
          %v448 = vshrl.u32 %v447, 7
          %v449 = vsub.s32 0, %v448
          %v450 = vrot.slane %v445, %v449
          %v452 = vadd.f32 %v437, %v450
          %v453 = vadd.f32 %v438, %v450
          %v454 = vadd.f32 %v439, %v450
          %v455 = vadd.f32 %v440, %v450
          %v456 = vadd.f32 %v441, %v450
          %v457 = vadd.f32 %v442, %v450
          %v458 = vadd.f32 %v443, %v450
          %v459 = vadd.f32 %v444, %v450
          %v460 = vmax.f32 %v452, 0.0
          %v461 = vmax.f32 %v453, 0.0
          %v462 = vmax.f32 %v454, 0.0
          %v463 = vmax.f32 %v455, 0.0
          %v464 = vmax.f32 %v456, 0.0
          %v465 = vmax.f32 %v457, 0.0
          %v466 = vmax.f32 %v458, 0.0
          %v467 = vmax.f32 %v459, 0.0
          %468 = vst [vmem:[%s228] sm:$0xff] %v460
          %469 = vst [vmem:[%s228 + $0x8] sm:$0xff] %v461
          %470 = vst [vmem:[%s228 + $0x10] sm:$0xff] %v462
          %471 = vst [vmem:[%s228 + $0x18] sm:$0xff] %v463
          %472 = vst [vmem:[%s228 + $0x20] sm:$0xff] %v464
          %473 = vst [vmem:[%s228 + $0x28] sm:$0xff] %v465
          %474 = vst [vmem:[%s228 + $0x30] sm:$0xff] %v466
          %475 = vst [vmem:[%s228 + $0x38] sm:$0xff] %v467
        $region40: #{tpu_custom_call.1} parent=31 // pred_fallthru
          _
        %s476 = sand.u32 %s128, 1
        %s477 = scalar_lea.sflag [#allocation4], %s476
        %s478 = sand.u32 %s128, 1
        %s479 = smul.addr %s478, 64
        %s480 = scalar_lea.vmem [#allocation3], %s479
        // Predicated region
        $region41: #{tpu_custom_call.1} parent=31 // pred_check
          %p481 = pneg %p138
        $region42: #{tpu_custom_call.1} parent=31 // pred_check_branch
          %483 = sbr.rel (%p481) target = $region44
        $region43: #{tpu_custom_call.1} parent=31 // pred_region
          %s484 = smul.u32 8, %s22
          %s486 = ssub.s32 1024, 1024
          %487 = vsyncadd %s477, %s486
          %s488 = sadd.s32 %s23, %s484
          %s489 = smul.addr %s488, 128
          %s490 = scalar_lea.hbm %s3, %s489
          %s491 = sshll.u32 %s480, 4
          %s492 = int_to_ptr.vmem [resolvable:$true] %s491
          %497 = dma.vmem_to_hbm [thread:$0]  %s492, 1024, %s490, %s477, 128, 128, 8
        $region44: #{tpu_custom_call.1} parent=31 // pred_fallthru
          _
      $region32: #{tpu_custom_call.1} parent=5 // pred_fallthru
        _
      %p498 = scmp.le.s32.totalorder 2, %s12
      // Predicated region
      $region45: #{tpu_custom_call.1} parent=5 // pred_check
        %p499 = pneg %p498
      $region46: #{tpu_custom_call.1} parent=5 // pred_check_branch
        %501 = sbr.rel (%p499) target = $region48
      $region47: #{tpu_custom_call.1} parent=5 // pred_region
        %s502 = ssub.s32 %s12, 2
        // Predicated region
        $region49: #{tpu_custom_call.1} parent=47 // pred_check
          %p503 = pneg %p144
        $region50: #{tpu_custom_call.1} parent=47 // pred_check_branch
          %505 = sbr.rel (%p503) target = $region52
        $region51: #{tpu_custom_call.1} parent=47 // pred_region
          %s506 = sand.u32 %s129, 1
          %s507 = scalar_lea.sflag [#allocation4], %s506
          %s508 = sand.u32 %s129, 1
          %s509 = smul.addr %s508, 64
          %s510 = scalar_lea.vmem [#allocation3], %s509
          %511 = dma.done %s507, 1024
        $region52: #{tpu_custom_call.1} parent=47 // pred_fallthru
          _
      $region48: #{tpu_custom_call.1} parent=5 // pred_fallthru
        _
    $region6: #{tpu_custom_call.1} parent=1 // loop_footer
      %s16 = sadd.s32 1, %s12
    $region7: #{tpu_custom_call.1} parent=1 // loop_footer_branch
      %11 = sbr.rel target = $region3
    $region8: #{tpu_custom_call.1} parent=1 // loop_exit
      _
    %512 = vsyncpa [#allocation4], 1
    %s513 = scalar_lea.sflag [#allocation4], 1
    %514 = vsyncpa %s513, 1

</llo_original>
